<compile_context>
chip_gen: v7x
topology: tpu7x:2x2x1
jax: 0.10.0
libtpu: 0.0.40
codegen_flags: <defaults>
</compile_context>

<pallas_src>
import functools

import jax
import jax.numpy as jnp
from jax.experimental import pallas as pl
from jax.experimental.pallas import tpu as pltpu


def _round_up(n, m):
    return ((n + m - 1) // m) * m


def _layout(obs_dim, h1, h2, num_outputs):
    """Row offsets / padded lane width for the packed weight slab."""
    two_h1, two_h2 = 2 * h1, 2 * h2
    wpad = _round_up(max(two_h1, two_h2, num_outputs + 1), 128)   # lane-dense width
    off_w2 = _round_up(obs_dim, 8)                                # sublane-aligned offsets
    off_wh = off_w2 + _round_up(two_h1, 8)
    rows = off_wh + _round_up(two_h2, 8)
    return off_w2, off_wh, rows, wpad


def fcnet_fused_kernel(x_ref, w_ref, b_ref, logits_ref, value_ref, *,
                       obs_dim, h1, h2, num_outputs, off_w2, off_wh):
    two_h1, two_h2 = 2 * h1, 2 * h2
    x = x_ref[...]                                   # (TB, obs_dim) obs tile
    b = b_ref[...]                                   # (3, WPAD) packed biases

    # --- fused layer 1 : one MXU pass for both trunks, x @ [w1 | wv1] ---
    w1 = w_ref[0:obs_dim, 0:two_h1]                  # static, aligned slice of weight slab
    h = jnp.tanh(jnp.dot(x, w1, preferred_element_type=jnp.float32)
                 + b[0:1, 0:two_h1])                 # (TB, 2*h1) = [policy_h1 | value_h1]

    # --- fused layer 2 : block-diagonal [[w2, 0], [0, wv2]] ---
    w2 = w_ref[off_w2:off_w2 + two_h1, 0:two_h2]
    h = jnp.tanh(jnp.dot(h, w2, preferred_element_type=jnp.float32)
                 + b[1:2, 0:two_h2])                 # (TB, 2*h2) = [policy_h2 | value_h2]

    # --- fused head : block-diagonal [[wl, 0], [0, wvo]], zero-padded lane-dense ---
    wh = w_ref[off_wh:off_wh + two_h2, :]            # (2*h2, WPAD)
    zv = jnp.dot(h, wh, preferred_element_type=jnp.float32) + b[2:3, :]   # (TB, WPAD)

    z = zv[:, :num_outputs]                          # pre-softmax action logits
    v = zv[:, num_outputs:num_outputs + 1]           # value head output

    # LogSoftmax over the action dim (max-shifted for stability)
    z_max = jnp.max(z, axis=-1, keepdims=True)
    z_shift = z - z_max
    lse = jnp.log(jnp.sum(jnp.exp(z_shift), axis=-1, keepdims=True))
    logits_ref[...] = z_shift - lse
    value_ref[...] = v


def make_fcnet_forward(obs_dim, hiddens, num_outputs, *, batch_tile=512):
    """Builds a jitted forward(x, packed_weights, packed_biases) -> (logits, value)."""
    h1, h2 = hiddens
    off_w2, off_wh, _, _ = _layout(obs_dim, h1, h2, num_outputs)
    kernel = functools.partial(
        fcnet_fused_kernel, obs_dim=obs_dim, h1=h1, h2=h2,
        num_outputs=num_outputs, off_w2=off_w2, off_wh=off_wh)

    def forward(x, wbuf, bbuf):
        B = x.shape[0]
        tb = min(batch_tile, B)                      # multiple of 8 or == B
        grid = (pl.cdiv(B, tb),)
        logits, value = pl.pallas_call(
            kernel,
            out_shape=(jax.ShapeDtypeStruct((B, num_outputs), jnp.float32),
                       jax.ShapeDtypeStruct((B, 1), jnp.float32)),
            grid=grid,
            in_specs=[
                pl.BlockSpec((tb, obs_dim), lambda i: (i, 0)),   # obs tile (pipelined)
                pl.BlockSpec(wbuf.shape, lambda i: (0, 0)),      # packed weights (resident)
                pl.BlockSpec(bbuf.shape, lambda i: (0, 0)),      # packed biases  (resident)
            ],
            out_specs=(
                pl.BlockSpec((tb, num_outputs), lambda i: (i, 0)),
                pl.BlockSpec((tb, 1), lambda i: (i, 0)),
            ),
            compiler_params=pltpu.CompilerParams(
                dimension_semantics=("parallel",)),  # v7x: shard batch over both TCs
        )(x, wbuf, bbuf)
        return logits, value[:, 0]                   # .squeeze(1) as in value_function()

    return jax.jit(forward)


# ------------------------- parameter construction / packing -------------------------

def normc_init(key, in_size, out_size, std=1.0):
    """RLlib normc_initializer; weights stored (in, out) so the kernel does y = x @ W + b."""
    w = jax.random.normal(key, (in_size, out_size), dtype=jnp.float32)
    norm = jnp.sqrt(jnp.sum(w * w, axis=0, keepdims=True))
    return w * (std / norm)


def make_params(key, obs_dim, hiddens, num_outputs):
    h1, h2 = hiddens
    ks = jax.random.split(key, 6)
    return {
        # shared policy trunk (normc(1.0), zero bias)
        "w1": normc_init(ks[0], obs_dim, h1, 1.0), "b1": jnp.zeros((1, h1), jnp.float32),
        "w2": normc_init(ks[1], h1, h2, 1.0),      "b2": jnp.zeros((1, h2), jnp.float32),
        # logits head (normc(0.01))
        "wl": normc_init(ks[2], h2, num_outputs, 0.01),
        "bl": jnp.zeros((1, num_outputs), jnp.float32),
        # separate value trunk (normc(1.0))
        "wv1": normc_init(ks[3], obs_dim, h1, 1.0), "bv1": jnp.zeros((1, h1), jnp.float32),
        "wv2": normc_init(ks[4], h1, h2, 1.0),      "bv2": jnp.zeros((1, h2), jnp.float32),
        # value head (normc(0.01))
        "wvo": normc_init(ks[5], h2, 1, 0.01),      "bvo": jnp.zeros((1, 1), jnp.float32),
    }


def pack_params(params, obs_dim, hiddens, num_outputs):
    """Pack the 13 parameter arrays into one weight slab + one bias slab (2 DMAs total)."""
    h1, h2 = hiddens
    two_h1, two_h2 = 2 * h1, 2 * h2
    off_w2, off_wh, rows, wpad = _layout(obs_dim, h1, h2, num_outputs)

    wbuf = jnp.zeros((rows, wpad), jnp.float32)
    # layer 1: concat [w1 | wv1]
    wbuf = wbuf.at[0:obs_dim, 0:h1].set(params["w1"])
    wbuf = wbuf.at[0:obs_dim, h1:two_h1].set(params["wv1"])
    # layer 2: block-diagonal [[w2, 0], [0, wv2]]
    wbuf = wbuf.at[off_w2:off_w2 + h1, 0:h2].set(params["w2"])
    wbuf = wbuf.at[off_w2 + h1:off_w2 + two_h1, h2:two_h2].set(params["wv2"])
    # head: block-diagonal [[wl, 0], [0, wvo]], zero-padded to lane-dense width
    wbuf = wbuf.at[off_wh:off_wh + h2, 0:num_outputs].set(params["wl"])
    wbuf = wbuf.at[off_wh + h2:off_wh + two_h2,
                   num_outputs:num_outputs + 1].set(params["wvo"])

    bbuf = jnp.zeros((3, wpad), jnp.float32)
    bbuf = bbuf.at[0, 0:h1].set(params["b1"][0])
    bbuf = bbuf.at[0, h1:two_h1].set(params["bv1"][0])
    bbuf = bbuf.at[1, 0:h2].set(params["b2"][0])
    bbuf = bbuf.at[1, h2:two_h2].set(params["bv2"][0])
    bbuf = bbuf.at[2, 0:num_outputs].set(params["bl"][0])
    bbuf = bbuf.at[2, num_outputs].set(params["bvo"][0, 0])
    return wbuf, bbuf


def fcnet_reference(x, p):
    """Pure-JAX unfused reference (validates the block-diagonal fusion has no cross-leak)."""
    hi = jax.lax.Precision.HIGHEST
    h = jnp.tanh(jnp.dot(x, p["w1"], precision=hi) + p["b1"])
    h = jnp.tanh(jnp.dot(h, p["w2"], precision=hi) + p["b2"])
    logits = jax.nn.log_softmax(jnp.dot(h, p["wl"], precision=hi) + p["bl"], axis=-1)
    vh = jnp.tanh(jnp.dot(x, p["wv1"], precision=hi) + p["bv1"])
    vh = jnp.tanh(jnp.dot(vh, p["wv2"], precision=hi) + p["bv2"])
    value = (jnp.dot(vh, p["wvo"], precision=hi) + p["bvo"])[:, 0]
    return logits, value


if __name__ == "__main__":
    # Small shapes consistent with the module: flat obs dim 16, hiddens=[32,32], 8 actions.
    B, OBS_DIM, HIDDENS, NUM_OUTPUTS = 8, 16, (32, 32), 8

    key = jax.random.PRNGKey(0)
    k_obs, k_param = jax.random.split(key)

    obs = jax.random.normal(k_obs, (B, OBS_DIM), dtype=jnp.float32)
    params = make_params(k_param, OBS_DIM, HIDDENS, NUM_OUTPUTS)
    wbuf, bbuf = pack_params(params, OBS_DIM, HIDDENS, NUM_OUTPUTS)

    forward = make_fcnet_forward(OBS_DIM, HIDDENS, NUM_OUTPUTS)
    logits, value = forward(obs, wbuf, bbuf)
    jax.block_until_ready((logits, value))

    assert logits.shape == (B, NUM_OUTPUTS)
    assert value.shape == (B,)
    # log-softmax rows exponentiate-sum to 1
    assert bool(jnp.allclose(jnp.sum(jnp.exp(logits), axis=-1), 1.0, atol=1e-5))

    # fused kernel matches the unfused reference (no policy/value cross-leak)
    ref_logits, ref_value = fcnet_reference(obs, params)
    assert bool(jnp.allclose(logits, ref_logits, atol=1e-3, rtol=1e-3))
    assert bool(jnp.allclose(value, ref_value, atol=1e-3, rtol=1e-3))

    print("KERNEL_OK")
</pallas_src>

<mosaic_0001>
module attributes {stable_mosaic.version = 11 : i64} {
  func.func @fcnet_fused_kernel(%arg0: i32, %arg1: memref<8x16xf32, #tpu.memory_space<vmem>>, %arg2: memref<144x128xf32, #tpu.memory_space<vmem>>, %arg3: memref<3x128xf32, #tpu.memory_space<vmem>>, %arg4: memref<8x8xf32, #tpu.memory_space<vmem>>, %arg5: memref<8x1xf32, #tpu.memory_space<vmem>>) attributes {dimension_semantics = [#tpu.dimension_semantics<parallel>], iteration_bounds = array<i64: 1>, scalar_prefetch = 0 : i64, scratch_operands = 0 : i64, tpu.core_type = #tpu.core_type<tc>, window_params = [{transform_indices = @transform_0, window_bounds = array<i64: 8, 16>}, {pipeline_mode = #tpu.pipeline_mode<synchronous>, transform_indices = @transform_1, window_bounds = array<i64: 144, 128>}, {pipeline_mode = #tpu.pipeline_mode<synchronous>, transform_indices = @transform_2, window_bounds = array<i64: 3, 128>}, {transform_indices = @transform_3, window_bounds = array<i64: 8, 8>}, {transform_indices = @transform_4, window_bounds = array<i64: 8, 1>}]} {
    %c0 = arith.constant 0 : index
    %c0_0 = arith.constant 0 : index
    %0 = vector.load %arg1[%c0, %c0_0] : memref<8x16xf32, #tpu.memory_space<vmem>>, vector<8x16xf32>
    %c0_1 = arith.constant 0 : index
    %c0_2 = arith.constant 0 : index
    %1 = vector.load %arg3[%c0_1, %c0_2] : memref<3x128xf32, #tpu.memory_space<vmem>>, vector<3x128xf32>
    %c0_3 = arith.constant 0 : index
    %c0_4 = arith.constant 0 : index
    %2 = vector.load %arg2[%c0_3, %c0_4] : memref<144x128xf32, #tpu.memory_space<vmem>>, vector<16x64xf32>
    %cst = arith.constant dense<0.000000e+00> : vector<8x64xf32>
    %3 = tpu.matmul %0, %2, %cst {dimension_numbers = #tpu.dot_dimension_numbers<[1], [0], [0], [1], [0, 0, 1, 1], [], []>} : vector<8x16xf32>, vector<16x64xf32>, vector<8x64xf32> -> vector<8x64xf32>
    %4 = vector.extract_strided_slice %1 {offsets = [0, 0], sizes = [1, 64], strides = [1, 1]} : vector<3x128xf32> to vector<1x64xf32>
    %5 = vector.broadcast %4 : vector<1x64xf32> to vector<8x64xf32>
    %6 = arith.addf %3, %5 : vector<8x64xf32>
    %7 = math.tanh %6 : vector<8x64xf32>
    %c16 = arith.constant 16 : index
    %c0_5 = arith.constant 0 : index
    %8 = vector.load %arg2[%c16, %c0_5] : memref<144x128xf32, #tpu.memory_space<vmem>>, vector<64x64xf32>
    %cst_6 = arith.constant dense<0.000000e+00> : vector<8x64xf32>
    %9 = tpu.matmul %7, %8, %cst_6 {dimension_numbers = #tpu.dot_dimension_numbers<[1], [0], [0], [1], [0, 0, 1, 1], [], []>} : vector<8x64xf32>, vector<64x64xf32>, vector<8x64xf32> -> vector<8x64xf32>
    %10 = vector.extract_strided_slice %1 {offsets = [1, 0], sizes = [1, 64], strides = [1, 1]} : vector<3x128xf32> to vector<1x64xf32>
    %11 = vector.broadcast %10 : vector<1x64xf32> to vector<8x64xf32>
    %12 = arith.addf %9, %11 : vector<8x64xf32>
    %13 = math.tanh %12 : vector<8x64xf32>
    %c80 = arith.constant 80 : index
    %c0_7 = arith.constant 0 : index
    %14 = vector.load %arg2[%c80, %c0_7] : memref<144x128xf32, #tpu.memory_space<vmem>>, vector<64x128xf32>
    %cst_8 = arith.constant dense<0.000000e+00> : vector<8x128xf32>
    %15 = tpu.matmul %13, %14, %cst_8 {dimension_numbers = #tpu.dot_dimension_numbers<[1], [0], [0], [1], [0, 0, 1, 1], [], []>} : vector<8x64xf32>, vector<64x128xf32>, vector<8x128xf32> -> vector<8x128xf32>
    %16 = vector.extract_strided_slice %1 {offsets = [2, 0], sizes = [1, 128], strides = [1, 1]} : vector<3x128xf32> to vector<1x128xf32>
    %17 = vector.broadcast %16 : vector<1x128xf32> to vector<8x128xf32>
    %18 = arith.addf %15, %17 : vector<8x128xf32>
    %19 = vector.extract_strided_slice %18 {offsets = [0, 0], sizes = [8, 8], strides = [1, 1]} : vector<8x128xf32> to vector<8x8xf32>
    %20 = vector.extract_strided_slice %18 {offsets = [0, 8], sizes = [8, 1], strides = [1, 1]} : vector<8x128xf32> to vector<8x1xf32>
    %cst_9 = arith.constant dense<0xFF800000> : vector<8xf32>
    %21 = vector.multi_reduction <maximumf>, %19, %cst_9 [1] : vector<8x8xf32> to vector<8xf32>
    %22 = vector.shape_cast %21 : vector<8xf32> to vector<8x1xf32>
    %23 = vector.broadcast %22 : vector<8x1xf32> to vector<8x8xf32>
    %24 = arith.subf %19, %23 : vector<8x8xf32>
    %25 = math.exp %24 : vector<8x8xf32>
    %cst_10 = arith.constant dense<0.000000e+00> : vector<8xf32>
    %26 = vector.multi_reduction <add>, %25, %cst_10 [1] : vector<8x8xf32> to vector<8xf32>
    %27 = vector.shape_cast %26 : vector<8xf32> to vector<8x1xf32>
    %28 = math.log %27 : vector<8x1xf32>
    %29 = vector.broadcast %28 : vector<8x1xf32> to vector<8x8xf32>
    %30 = arith.subf %24, %29 : vector<8x8xf32>
    %c0_11 = arith.constant 0 : index
    %c0_12 = arith.constant 0 : index
    %31 = vector.load %arg4[%c0_11, %c0_12] : memref<8x8xf32, #tpu.memory_space<vmem>>, vector<8x8xf32>
    tpu.vector_store %arg4[%c0_11, %c0_12], %30 {strides = array<i32>} : memref<8x8xf32, #tpu.memory_space<vmem>>, vector<8x8xf32>,
    %c0_13 = arith.constant 0 : index
    %c0_14 = arith.constant 0 : index
    %32 = vector.load %arg5[%c0_13, %c0_14] : memref<8x1xf32, #tpu.memory_space<vmem>>, vector<8x1xf32>
    tpu.vector_store %arg5[%c0_13, %c0_14], %20 {strides = array<i32>} : memref<8x1xf32, #tpu.memory_space<vmem>>, vector<8x1xf32>,
    return
  }
  func.func @transform_0(%arg0: i32) -> (i32, i32) {
    %c0_i32 = arith.constant 0 : i32
    %c0_i32_0 = arith.constant 0 : i32
    return %arg0, %c0_i32 : i32, i32
  }
  func.func @transform_1(%arg0: i32) -> (i32, i32) {
    %c0_i32 = arith.constant 0 : i32
    %c0_i32_0 = arith.constant 0 : i32
    %c0_i32_1 = arith.constant 0 : i32
    return %c0_i32, %c0_i32_0 : i32, i32
  }
  func.func @transform_2(%arg0: i32) -> (i32, i32) {
    %c0_i32 = arith.constant 0 : i32
    %c0_i32_0 = arith.constant 0 : i32
    %c0_i32_1 = arith.constant 0 : i32
    return %c0_i32, %c0_i32_0 : i32, i32
  }
  func.func @transform_3(%arg0: i32) -> (i32, i32) {
    %c0_i32 = arith.constant 0 : i32
    %c0_i32_0 = arith.constant 0 : i32
    return %arg0, %c0_i32 : i32, i32
  }
  func.func @transform_4(%arg0: i32) -> (i32, i32) {
    %c0_i32 = arith.constant 0 : i32
    %c0_i32_0 = arith.constant 0 : i32
    return %arg0, %c0_i32 : i32, i32
  }
}

</mosaic_0001>

<llo_original>
// kernel: forward.1
$region0: #{forward.1}
  #allocation0 [shape = 'u32[]', space=smem, size = 0x4, offset = 0x4, fixed_abs, tag = 'smem constant byte address 0x4 - core index']
  #allocation1 [shape = 'u32[144,128]{1,0:T(1,128)}', space=vmem, size = 0x12000, scoped, tag = 'internal scratch']
  %s0 = inlined_call_operand.hbm [shape: f32[8,16], index: 0, kind: input, shape index: {}]
  %s1 = inlined_call_operand.hbm [shape: f32[144,128], index: 1, kind: input, shape index: {}]
  %s2 = inlined_call_operand.vmem [shape: f32[3,128], index: 2, kind: input, shape index: {}]
  %s3 = inlined_call_operand.hbm [shape: f32[8,8], index: 3, kind: output, shape index: {0}]
  %s4 = inlined_call_operand.vmem [shape: f32[8,1], index: 4, kind: output, shape index: {1}]
  %5 = xla_tuple %s3, %s4
  %s6 = sld [smem:[#allocation0]]
  $region38: #{forward.1} parent=0
    _
  %s8 = ssub.s32 1, %s6
  %s9 = scalar_select 0, %s8, %s6
  $region1: #{forward.1} parent=0
    #allocation2 [shape = 'u8[4096]{0}', space=vmem, size = 0x1000, scoped, tag = 'input window, operand 0, single buffered']
    #allocation3 [shape = 's32[1]{0}', space=sflag, size = 0x4, scoped, tag = 'scoped memory for forward.1']
    #allocation4 [shape = 's32[1]{0}', space=sflag, size = 0x4, scoped, tag = 'scoped memory for forward.1']
    #allocation5 [shape = 'u8[73728]{0}', space=vmem, size = 0x12000, scoped, tag = 'input window, operand 1, single buffered']
    #allocation6 [shape = 's32[1]{0}', space=sflag, size = 0x4, scoped, tag = 'scoped memory for forward.1']
    #allocation7 [shape = 'u8[4096]{0}', space=vmem, size = 0x1000, scoped, tag = 'output window, operand 0, single buffered']
    %10 = vsyncpa [#allocation3], 0
    %11 = vsyncpa [#allocation6], 0
    %12 = vsyncpa [#allocation4], 0
    // Predicated region
    $region2: #{forward.1} parent=1 // pred_check
      _
    $region3: #{forward.1} parent=1 // pred_check_branch
      %14 = sbr.rel (0) target = $region5
    $region4: #{forward.1} parent=1 // pred_region
      %s16 = ssub.s32 128, 128
      %17 = vsyncadd [#allocation3], %s16
      %s19 = sshll.u32 [#allocation2], 4
      %s20 = int_to_ptr.vmem [resolvable:$true] %s19
      %22 = dma.hbm_to_vmem [thread:$0]  %s0, 128, %s20, [#allocation3]
    $region5: #{forward.1} parent=1 // pred_fallthru
      _
    // Predicated region
    $region6: #{forward.1} parent=1 // pred_check
      _
    $region7: #{forward.1} parent=1 // pred_check_branch
      %24 = sbr.rel (0) target = $region9
    $region8: #{forward.1} parent=1 // pred_region
      %s26 = ssub.s32 2304, 2304
      %27 = vsyncadd [#allocation6], %s26
      %s28 = sshll.u32 [#allocation5], 4
      %s29 = int_to_ptr.vmem [resolvable:$true] %s28
      %34 = dma.hbm_to_vmem [thread:$0]  %s1, 2304, %s29, [#allocation6], 128, 128, 8
    $region9: #{forward.1} parent=1 // pred_fallthru
      _
    // Predicated region
    $region10: #{forward.1} parent=1 // pred_check
      _
    $region11: #{forward.1} parent=1 // pred_check_branch
      %36 = sbr.rel (0) target = $region13
    $region12: #{forward.1} parent=1 // pred_region
      _
    $region13: #{forward.1} parent=1 // pred_fallthru
      _
    // Predicated region
    $region14: #{forward.1} parent=1 // pred_check
      _
    $region15: #{forward.1} parent=1 // pred_check_branch
      %38 = sbr.rel (0) target = $region17
    $region16: #{forward.1} parent=1 // pred_region
      %39 = dma.done [#allocation3], 128
    $region17: #{forward.1} parent=1 // pred_fallthru
      _
    // Predicated region
    $region18: #{forward.1} parent=1 // pred_check
      _
    $region19: #{forward.1} parent=1 // pred_check_branch
      %41 = sbr.rel (0) target = $region21
    $region20: #{forward.1} parent=1 // pred_region
      %42 = dma.done [#allocation6], 2304
    $region21: #{forward.1} parent=1 // pred_fallthru
      _
    %v43 = vld [vmem:[#allocation2] sm:$0xff]
    %v44 = vld [vmem:[%s2] sm:$0x7]
    %v45 = vld [vmem:[#allocation5] sm:$0xff]
    %v46 = vld [vmem:[#allocation5 + $0x8] sm:$0xff]
    %v47 = vlaneseq
    %v48 = vshrl.u32 %v47, 7
    %v49 = vsub.s32 0, %v48
    %v50 = vrot.slane %v44, %v49
    %vm51 = vcmask 130048
    %v53 = vsel %vm51, %v43, 0
    %55 = vmatprep.subr.mxu0 0.0
    %56 = vmatpush1.msra.mxu0 %v45
    %57 = vmatprep.subr.mxu0 0.0
    %58 = vmatpush1.msra.mxu0 %v46
    %59 = vmatprep.subr.mxu0 0.0
    %60 = vmatpush1.msra.mxu0 0.0
    %61 = vmatprep.subr.mxu0 0.0
    %62 = vmatpush1.msra.mxu0 0.0
    %63 = vmatprep.subr.mxu0 0.0
    %64 = vmatpush1.msra.mxu0 0.0
    %65 = vmatprep.subr.mxu0 0.0
    %66 = vmatpush1.msra.mxu0 0.0
    %67 = vmatprep.subr.mxu0 0.0
    %68 = vmatpush1.msra.mxu0 0.0
    %69 = vmatprep.subr.mxu0 0.0
    %70 = vmatpush1.msra.mxu0 0.0
    %71 = vmatprep.subr.mxu0 0.0
    %72 = vmatpush1.msra.mxu0 0.0
    %73 = vmatprep.subr.mxu0 0.0
    %74 = vmatpush1.msra.mxu0 0.0
    %75 = vmatprep.subr.mxu0 0.0
    %76 = vmatpush1.msra.mxu0 0.0
    %77 = vmatprep.subr.mxu0 0.0
    %78 = vmatpush1.msra.mxu0 0.0
    %79 = vmatprep.subr.mxu0 0.0
    %80 = vmatpush1.msra.mxu0 0.0
    %81 = vmatprep.subr.mxu0 0.0
    %82 = vmatpush1.msra.mxu0 0.0
    %83 = vmatprep.subr.mxu0 0.0
    %84 = vmatpush1.msra.mxu0 0.0
    %85 = vmatprep.subr.mxu0 0.0
    %86 = vmatpush1.msra.mxu0 0.0
    %87 = vmatprep.subr.mxu0 0.0
    %88 = vmatpush1.msra.mxu0 0.0
    %89 = vmatprep.subr.mxu0 0.0
    %90 = vmatpush1.msra.mxu0 0.0
    %91 = vmatprep.subr.mxu0 0.0
    %92 = vmatpush1.msra.mxu0 0.0
    %93 = vmatprep.subr.mxu0 0.0
    %94 = vmatpush1.msra.mxu0 0.0
    %95 = vmatprep.subr.mxu0 0.0
    %96 = vmatpush1.msra.mxu0 0.0
    %97 = vmatprep.subr.mxu0 0.0
    %98 = vmatpush1.msra.mxu0 0.0
    %99 = vmatprep.subr.mxu0 0.0
    %100 = vmatpush1.msra.mxu0 0.0
    %101 = vmatprep.subr.mxu0 0.0
    %102 = vmatpush1.msra.mxu0 0.0
    %103 = vmatprep.subr.mxu0 0.0
    %104 = vmatpush1.msra.mxu0 0.0
    %105 = vmatprep.subr.mxu0 0.0
    %106 = vmatpush1.msra.mxu0 0.0
    %107 = vmatprep.subr.mxu0 0.0
    %108 = vmatpush1.msra.mxu0 0.0
    %109 = vmatprep.subr.mxu0 0.0
    %110 = vmatpush1.msra.mxu0 0.0
    %111 = vmatprep.subr.mxu0 0.0
    %112 = vmatpush1.msra.mxu0 0.0
    %113 = vmatprep.subr.mxu0 0.0
    %114 = vmatpush1.msra.mxu0 0.0
    %115 = vmatprep.subr.mxu0 0.0
    %116 = vmatpush1.msra.mxu0 0.0
    %117 = vmatprep.subr.mxu0 0.0
    %118 = vmatpush1.msra.mxu0 0.0
    %119 = vmatprep.mubr.f32.mxu0 0.0
    %120 = vmatmul.mubr.f32.gmra.mrb[0].mxu0 %v53
    %v121 = vpop.f32.mrb[0].mxu0
    %v122 = vadd.f32 %v50, %v121
    %v123 = vpop.f32.mrb[0].mxu0
    %124 = vdwg.mxu0
    %v125 = vtanh.pop %v122
    %v126 = vld [vmem:[#allocation5 + $0x10] sm:$0xff]
    %v127 = vld [vmem:[#allocation5 + $0x18] sm:$0xff]
    %v128 = vld [vmem:[#allocation5 + $0x20] sm:$0xff]
    %v129 = vld [vmem:[#allocation5 + $0x28] sm:$0xff]
    %v130 = vld [vmem:[#allocation5 + $0x30] sm:$0xff]
    %v131 = vld [vmem:[#allocation5 + $0x38] sm:$0xff]
    %v132 = vld [vmem:[#allocation5 + $0x40] sm:$0xff]
    %v133 = vld [vmem:[#allocation5 + $0x48] sm:$0xff]
    %v134 = vlaneseq
    %v135 = vshrl.u32 %v134, 7
    %v136 = vsub.s32 1, %v135
    %v137 = vrot.slane %v44, %v136
    %vm138 = vcmask 523264
    %v140 = vsel %vm138, %v125, 0
    %142 = vmatprep.subr.mxu0 0.0
    %143 = vmatpush1.msra.mxu0 %v126
    %144 = vmatprep.subr.mxu0 0.0
    %145 = vmatpush1.msra.mxu0 %v127
    %146 = vmatprep.subr.mxu0 0.0
    %147 = vmatpush1.msra.mxu0 %v128
    %148 = vmatprep.subr.mxu0 0.0
    %149 = vmatpush1.msra.mxu0 %v129
    %150 = vmatprep.subr.mxu0 0.0
    %151 = vmatpush1.msra.mxu0 %v130
    %152 = vmatprep.subr.mxu0 0.0
    %153 = vmatpush1.msra.mxu0 %v131
    %154 = vmatprep.subr.mxu0 0.0
    %155 = vmatpush1.msra.mxu0 %v132
    %156 = vmatprep.subr.mxu0 0.0
    %157 = vmatpush1.msra.mxu0 %v133
    %158 = vmatprep.subr.mxu0 0.0
    %159 = vmatpush1.msra.mxu0 0.0
    %160 = vmatprep.subr.mxu0 0.0
    %161 = vmatpush1.msra.mxu0 0.0
    %162 = vmatprep.subr.mxu0 0.0
    %163 = vmatpush1.msra.mxu0 0.0
    %164 = vmatprep.subr.mxu0 0.0
    %165 = vmatpush1.msra.mxu0 0.0
    %166 = vmatprep.subr.mxu0 0.0
    %167 = vmatpush1.msra.mxu0 0.0
    %168 = vmatprep.subr.mxu0 0.0
    %169 = vmatpush1.msra.mxu0 0.0
    %170 = vmatprep.subr.mxu0 0.0
    %171 = vmatpush1.msra.mxu0 0.0
    %172 = vmatprep.subr.mxu0 0.0
    %173 = vmatpush1.msra.mxu0 0.0
    %174 = vmatprep.subr.mxu0 0.0
    %175 = vmatpush1.msra.mxu0 0.0
    %176 = vmatprep.subr.mxu0 0.0
    %177 = vmatpush1.msra.mxu0 0.0
    %178 = vmatprep.subr.mxu0 0.0
    %179 = vmatpush1.msra.mxu0 0.0
    %180 = vmatprep.subr.mxu0 0.0
    %181 = vmatpush1.msra.mxu0 0.0
    %182 = vmatprep.subr.mxu0 0.0
    %183 = vmatpush1.msra.mxu0 0.0
    %184 = vmatprep.subr.mxu0 0.0
    %185 = vmatpush1.msra.mxu0 0.0
    %186 = vmatprep.subr.mxu0 0.0
    %187 = vmatpush1.msra.mxu0 0.0
    %188 = vmatprep.subr.mxu0 0.0
    %189 = vmatpush1.msra.mxu0 0.0
    %190 = vmatprep.subr.mxu0 0.0
    %191 = vmatpush1.msra.mxu0 0.0
    %192 = vmatprep.subr.mxu0 0.0
    %193 = vmatpush1.msra.mxu0 0.0
    %194 = vmatprep.subr.mxu0 0.0
    %195 = vmatpush1.msra.mxu0 0.0
    %196 = vmatprep.subr.mxu0 0.0
    %197 = vmatpush1.msra.mxu0 0.0
    %198 = vmatprep.subr.mxu0 0.0
    %199 = vmatpush1.msra.mxu0 0.0
    %200 = vmatprep.subr.mxu0 0.0
    %201 = vmatpush1.msra.mxu0 0.0
    %202 = vmatprep.subr.mxu0 0.0
    %203 = vmatpush1.msra.mxu0 0.0
    %204 = vmatprep.subr.mxu0 0.0
    %205 = vmatpush1.msra.mxu0 0.0
    %206 = vmatprep.mubr.f32.mxu0 0.0
    %207 = vmatmul.mubr.f32.gmra.mrb[0].mxu0 %v140
    %v208 = vpop.f32.mrb[0].mxu0
    %v209 = vadd.f32 %v137, %v208
    %v210 = vpop.f32.mrb[0].mxu0
    %211 = vdwg.mxu0
    %v212 = vtanh.pop %v209
    %v213 = vld [vmem:[#allocation5 + $0x50] sm:$0xff]
    %v214 = vld [vmem:[#allocation5 + $0x58] sm:$0xff]
    %v215 = vld [vmem:[#allocation5 + $0x60] sm:$0xff]
    %v216 = vld [vmem:[#allocation5 + $0x68] sm:$0xff]
    %v217 = vld [vmem:[#allocation5 + $0x70] sm:$0xff]
    %v218 = vld [vmem:[#allocation5 + $0x78] sm:$0xff]
    %v219 = vld [vmem:[#allocation5 + $0x80] sm:$0xff]
    %v220 = vld [vmem:[#allocation5 + $0x88] sm:$0xff]
    %v221 = vlaneseq
    %v222 = vshrl.u32 %v221, 7
    %v223 = vsub.s32 2, %v222
    %v224 = vrot.slane %v44, %v223
    %v226 = vsel %vm138, %v212, 0
    %228 = vmatprep.subr.mxu0 0.0
    %229 = vmatpush1.msra.mxu0 %v213
    %230 = vmatprep.subr.mxu0 0.0
    %231 = vmatpush1.msra.mxu0 %v214
    %232 = vmatprep.subr.mxu0 0.0
    %233 = vmatpush1.msra.mxu0 %v215
    %234 = vmatprep.subr.mxu0 0.0
    %235 = vmatpush1.msra.mxu0 %v216
    %236 = vmatprep.subr.mxu0 0.0
    %237 = vmatpush1.msra.mxu0 %v217
    %238 = vmatprep.subr.mxu0 0.0
    %239 = vmatpush1.msra.mxu0 %v218
    %240 = vmatprep.subr.mxu0 0.0
    %241 = vmatpush1.msra.mxu0 %v219
    %242 = vmatprep.subr.mxu0 0.0
    %243 = vmatpush1.msra.mxu0 %v220
    %244 = vmatprep.subr.mxu0 0.0
    %245 = vmatpush1.msra.mxu0 0.0
    %246 = vmatprep.subr.mxu0 0.0
    %247 = vmatpush1.msra.mxu0 0.0
    %248 = vmatprep.subr.mxu0 0.0
    %249 = vmatpush1.msra.mxu0 0.0
    %250 = vmatprep.subr.mxu0 0.0
    %251 = vmatpush1.msra.mxu0 0.0
    %252 = vmatprep.subr.mxu0 0.0
    %253 = vmatpush1.msra.mxu0 0.0
    %254 = vmatprep.subr.mxu0 0.0
    %255 = vmatpush1.msra.mxu0 0.0
    %256 = vmatprep.subr.mxu0 0.0
    %257 = vmatpush1.msra.mxu0 0.0
    %258 = vmatprep.subr.mxu0 0.0
    %259 = vmatpush1.msra.mxu0 0.0
    %260 = vmatprep.subr.mxu0 0.0
    %261 = vmatpush1.msra.mxu0 0.0
    %262 = vmatprep.subr.mxu0 0.0
    %263 = vmatpush1.msra.mxu0 0.0
    %264 = vmatprep.subr.mxu0 0.0
    %265 = vmatpush1.msra.mxu0 0.0
    %266 = vmatprep.subr.mxu0 0.0
    %267 = vmatpush1.msra.mxu0 0.0
    %268 = vmatprep.subr.mxu0 0.0
    %269 = vmatpush1.msra.mxu0 0.0
    %270 = vmatprep.subr.mxu0 0.0
    %271 = vmatpush1.msra.mxu0 0.0
    %272 = vmatprep.subr.mxu0 0.0
    %273 = vmatpush1.msra.mxu0 0.0
    %274 = vmatprep.subr.mxu0 0.0
    %275 = vmatpush1.msra.mxu0 0.0
    %276 = vmatprep.subr.mxu0 0.0
    %277 = vmatpush1.msra.mxu0 0.0
    %278 = vmatprep.subr.mxu0 0.0
    %279 = vmatpush1.msra.mxu0 0.0
    %280 = vmatprep.subr.mxu0 0.0
    %281 = vmatpush1.msra.mxu0 0.0
    %282 = vmatprep.subr.mxu0 0.0
    %283 = vmatpush1.msra.mxu0 0.0
    %284 = vmatprep.subr.mxu0 0.0
    %285 = vmatpush1.msra.mxu0 0.0
    %286 = vmatprep.subr.mxu0 0.0
    %287 = vmatpush1.msra.mxu0 0.0
    %288 = vmatprep.subr.mxu0 0.0
    %289 = vmatpush1.msra.mxu0 0.0
    %290 = vmatprep.subr.mxu0 0.0
    %291 = vmatpush1.msra.mxu0 0.0
    %292 = vmatprep.mubr.f32.mxu0 0.0
    %293 = vmatmul.mubr.f32.gmra.mrb[0].mxu0 %v226
    %v294 = vpop.f32.mrb[0].mxu0
    %v295 = vadd.f32 %v224, %v294
    %v296 = vpop.f32.mrb[0].mxu0
    %297 = vdwg.mxu0
    %vm298 = vcmask 64512
    %v299 = vsel %vm298, %v295, -inf
    %300 = vmax.xlane.f32.xlu0 %v299
    %v301 = vpop.xlane.xlu0 %300
    %v302 = vsub.f32 %v295, %v301
    %v303 = vmul.f32 %v302, 1.442695
    %v304 = vpow.pop %v303
    %v305 = vsel %vm298, %v304, 0.0
    %306 = vadd.xlane.f32.xlu0 %v305
    %v307 = vpop.xlane.xlu0 %306
    %v308 = vlog2.pop %v307
    %v309 = vmul.f32 %v308, 0.6931472
    %v310 = vsub.f32 %v302, %v309
    %311 = vst.msk [vmem:[#allocation7] sm:$0xff] %vm298, %v310
    %313 = vrot.lane.b32.xlu0 %v295, 120
    %v314 = vpop.permute.xlu0 %313
    %vm316 = vcmask 7168
    %317 = vst.msk [vmem:[%s4] sm:$0xff] %vm316, %v314
    // Predicated region
    $region22: #{forward.1} parent=1 // pred_check
      _
    $region23: #{forward.1} parent=1 // pred_check_branch
      %319 = sbr.rel (0) target = $region25
    $region24: #{forward.1} parent=1 // pred_region
      %s321 = ssub.s32 128, 128
      %322 = vsyncadd [#allocation4], %s321
      %s324 = sshll.u32 [#allocation7], 4
      %s325 = int_to_ptr.vmem [resolvable:$true] %s324
      %327 = dma.vmem_to_hbm [thread:$0]  %s325, 128, %s3, [#allocation4]
    $region25: #{forward.1} parent=1 // pred_fallthru
      _
    // Predicated region
    $region26: #{forward.1} parent=1 // pred_check
      _
    $region27: #{forward.1} parent=1 // pred_check_branch
      %329 = sbr.rel (0) target = $region29
    $region28: #{forward.1} parent=1 // pred_region
      _
    $region29: #{forward.1} parent=1 // pred_fallthru
      _
    // Predicated region
    $region30: #{forward.1} parent=1 // pred_check
      _
    $region31: #{forward.1} parent=1 // pred_check_branch
      %331 = sbr.rel (0) target = $region33
    $region32: #{forward.1} parent=1 // pred_region
      %332 = dma.done [#allocation4], 128
    $region33: #{forward.1} parent=1 // pred_fallthru
      _
    // Predicated region
    $region34: #{forward.1} parent=1 // pred_check
      _
    $region35: #{forward.1} parent=1 // pred_check_branch
      %334 = sbr.rel (0) target = $region37
    $region36: #{forward.1} parent=1 // pred_region
      _
    $region37: #{forward.1} parent=1 // pred_fallthru
      _
    %335 = vsyncpa [#allocation3], 1
    %336 = vsyncpa [#allocation6], 1
    %337 = vsyncpa [#allocation4], 1

</llo_original>
